<compile_context>
chip_gen: v7x
topology: tpu7x:2x2x1
jax: 0.10.0
libtpu: 0.0.40
codegen_flags: <defaults>
</compile_context>

<pallas_src>
import functools

import jax
import jax.numpy as jnp
from jax.experimental import pallas as pl
from jax.experimental.pallas import tpu as pltpu


def _dsimam_kernel(x_ref, o_ref, *, inv_hw, compute_dtype):
    """One (TM, HW) tile: per-row spatial mean fused with the elementwise enhance.

    INVARIANT: rows are fully independent.  A ragged final row-block relies on
    Pallas' masked boundary store discarding the garbage out-of-bounds rows.
    Any future change that reduces ACROSS rows (or shares a tile-wide value)
    would silently read junk — keep all reductions along axis=-1 only.
    """
    # Pass 1: row-sum in f32 (numerically safe accumulation for the mean).
    x_f32 = x_ref[...].astype(jnp.float32)
    mean_x = (jnp.sum(x_f32, axis=-1, keepdims=True) * inv_hw).astype(compute_dtype)
    # Pass 2: re-read the VMEM-resident tile for the elementwise chain so a
    # full-tile f32 upcast is not kept live across the reduction (re-reading a
    # VMEM tile is ~free on the vld slot; cuts scratch/vreg pressure).
    x = x_ref[...].astype(compute_dtype)
    d = x - mean_x
    d = d * d
    # sigmoid(d) + 0.5 == 1 + 0.5 * tanh(d / 2): a single EUP transcendental,
    # no f32 divide on the VALU.  Weakly-typed Python scalars keep the whole
    # chain in `compute_dtype` (bf16 on v6e/v7x bf16 inputs, f32 otherwise).
    func = 1.0 + 0.5 * jnp.tanh(0.5 * d)
    o_ref[...] = (x * func).astype(o_ref.dtype)


def _chip_info():
    """Returns (physical VMEM bytes per core, device-kind string, TCs per chip)."""
    vmem_bytes = 128 << 20
    kind = ""
    try:
        vmem_bytes = int(pltpu.get_tpu_info().vmem_capacity_bytes)
    except Exception:
        pass
    try:
        kind = jax.devices()[0].device_kind.lower()
    except Exception:
        pass
    # v7x: 2 TensorCores/chip, 64 MiB VMEM per TC; v5e/v6e: 1 TC, 128 MiB.
    num_cores = 2 if ("v7" in kind or "7x" in kind or vmem_bytes <= (64 << 20)) else 1
    return vmem_bytes, kind, num_cores


def _pick_tm(bc, hw, per_row_bytes, tile_budget_bytes, num_cores):
    """Largest row tile fitting the VMEM tile budget (multiple of 8 or full BC)."""
    if bc <= 8:
        return bc  # full-extent block for tiny inputs is always legal
    max_tm = tile_budget_bytes // max(per_row_bytes, 1)
    max_tm = (int(min(max(max_tm, 8), 4096)) // 8) * 8
    tm = min(max_tm, ((bc + 7) // 8) * 8)
    if num_cores >= 2:
        # v7x: cap the tile at ceil(BC / num_cores) so the "parallel" row axis
        # produces >= num_cores grid steps and shards across both TensorCores.
        half = (((bc + num_cores - 1) // num_cores + 7) // 8) * 8
        tm = min(tm, max(8, half))
    # Prefer a tile that divides BC exactly (no ragged final block), but never
    # shrink below half the budgeted tile to get it.
    for cand in range(tm, max(7, tm // 2), -8):
        if bc % cand == 0:
            return cand
    return tm


def dsimam_block(x, *, tm=None):
    """x: (B, C, H, W) float array -> (B, C, H, W), same semantics as DSimAMBlock."""
    B, C, H, W = x.shape
    BC, HW = B * C, H * W
    x2d = x.reshape(BC, HW)  # rows = (b, c), lanes = flattened spatial (free reshape)
    itemsize = jnp.dtype(x.dtype).itemsize

    phys_vmem, kind, num_cores = _chip_info()
    is_v5 = "v5" in kind
    # bf16 elementwise/tanh path on chips with bf16 VALU+EUP (v6e/v7x); f32 on
    # v5e and for f32 inputs.  The mean accumulation is always f32.
    compute_dtype = (
        jnp.bfloat16 if (x.dtype == jnp.bfloat16 and not is_v5) else jnp.float32
    )
    compute_itemsize = jnp.dtype(compute_dtype).itemsize

    # Clamp the scoped-VMEM limit to the chip: ~48 MiB on v7x (64 MiB physical
    # per TC), up to 96 MiB on v5e/v6e (128 MiB physical), never below the
    # 32 MiB needed to beat v5e's 16 MiB default scoped limit.
    vmem_limit = int(min(96 << 20, (phys_vmem * 3) // 4))
    vmem_limit = max(vmem_limit, 32 << 20)
    tile_budget = vmem_limit - (8 << 20)  # headroom for Mosaic internal scratch

    # Per-row VMEM cost: double-buffered input + output tiles at the I/O dtype,
    # plus ~3 live full-width temporaries at the compute dtype (upcast/d/func).
    per_row_bytes = HW * (4 * itemsize + 3 * compute_itemsize)

    if tm is None:
        tm = _pick_tm(BC, HW, per_row_bytes, tile_budget, num_cores)
    else:
        # Harden the override: multiple of 8 (or the full BC), within budget.
        tm = int(tm)
        if BC < 8 or tm >= BC:
            tm = BC
        else:
            tm = max(8, (tm // 8) * 8)
            budget_tm = max(8, ((tile_budget // max(per_row_bytes, 1)) // 8) * 8)
            tm = min(tm, budget_tm)
    tm = min(tm, BC) if BC >= 8 else BC  # block dim == full dim is always legal

    grid = (pl.cdiv(BC, tm),)

    out2d = pl.pallas_call(
        functools.partial(
            _dsimam_kernel, inv_hw=1.0 / HW, compute_dtype=compute_dtype
        ),
        out_shape=jax.ShapeDtypeStruct((BC, HW), x.dtype),
        grid_spec=pl.GridSpec(
            grid=grid,
            in_specs=[pl.BlockSpec((tm, HW), lambda i: (i, 0))],
            out_specs=pl.BlockSpec((tm, HW), lambda i: (i, 0)),
        ),
        compiler_params=pltpu.CompilerParams(
            dimension_semantics=("parallel",),
            vmem_limit_bytes=vmem_limit,
        ),
    )(x2d)

    return out2d.reshape(B, C, H, W)


def _reference(x):
    xf = x.astype(jnp.float32)
    mean_x = jnp.mean(xf, axis=(2, 3), keepdims=True)
    d = (xf - mean_x) ** 2
    func = 1.0 / (1.0 + jnp.exp(-d)) + 0.5
    return xf * func


if __name__ == "__main__":
    key = jax.random.PRNGKey(0)
    k1, k2, k3 = jax.random.split(key, 3)

    # Primary small shape from the module spec (BC=8 -> single full-extent block).
    B, C, H, W = 2, 4, 16, 16
    x = jax.random.normal(k1, (B, C, H, W), dtype=jnp.float32)
    out = jax.block_until_ready(dsimam_block(x))
    ref = _reference(x)
    assert out.shape == (B, C, H, W)
    assert jnp.allclose(out, ref, atol=2e-5, rtol=2e-5), "mismatch vs reference (small)"

    # Second f32 shape exercising the multi-step / megacore-split grid path.
    B2, C2, H2, W2 = 2, 48, 16, 16
    x2 = jax.random.normal(k2, (B2, C2, H2, W2), dtype=jnp.float32)
    out2 = jax.block_until_ready(dsimam_block(x2))
    ref2 = _reference(x2)
    assert jnp.allclose(out2, ref2, atol=2e-5, rtol=2e-5), "mismatch vs reference (tiled)"

    # bf16 input exercises the bf16 elementwise/tanh path (f32 on v5-class chips).
    x3 = jax.random.normal(k3, (2, 16, 16, 16), dtype=jnp.bfloat16)
    out3 = jax.block_until_ready(dsimam_block(x3))
    ref3 = _reference(x3)
    assert jnp.allclose(out3.astype(jnp.float32), ref3, atol=5e-2, rtol=5e-2), (
        "mismatch vs reference (bf16)"
    )

    print("KERNEL_OK")
</pallas_src>

<mosaic_0001>
module attributes {stable_mosaic.version = 11 : i64} {
  func.func @_dsimam_kernel(%arg0: i32, %arg1: memref<8x256xf32, #tpu.memory_space<vmem>>, %arg2: memref<8x256xf32, #tpu.memory_space<vmem>>) attributes {dimension_semantics = [#tpu.dimension_semantics<parallel>], iteration_bounds = array<i64: 1>, scalar_prefetch = 0 : i64, scratch_operands = 0 : i64, tpu.core_type = #tpu.core_type<tc>, window_params = [{transform_indices = @transform_0, window_bounds = array<i64: 8, 256>}, {transform_indices = @transform_1, window_bounds = array<i64: 8, 256>}]} {
    %c0 = arith.constant 0 : index
    %c0_0 = arith.constant 0 : index
    %0 = vector.load %arg1[%c0, %c0_0] : memref<8x256xf32, #tpu.memory_space<vmem>>, vector<8x256xf32>
    %cst = arith.constant dense<0.000000e+00> : vector<8xf32>
    %1 = vector.multi_reduction <add>, %0, %cst [1] : vector<8x256xf32> to vector<8xf32>
    %2 = vector.shape_cast %1 : vector<8xf32> to vector<8x1xf32>
    %cst_1 = arith.constant 3.906250e-03 : f32
    %3 = vector.broadcast %cst_1 : f32 to vector<8x1xf32>
    %4 = arith.mulf %2, %3 : vector<8x1xf32>
    %c0_2 = arith.constant 0 : index
    %c0_3 = arith.constant 0 : index
    %5 = vector.load %arg1[%c0_2, %c0_3] : memref<8x256xf32, #tpu.memory_space<vmem>>, vector<8x256xf32>
    %6 = vector.broadcast %4 : vector<8x1xf32> to vector<8x256xf32>
    %7 = arith.subf %5, %6 : vector<8x256xf32>
    %8 = arith.mulf %7, %7 : vector<8x256xf32>
    %cst_4 = arith.constant 5.000000e-01 : f32
    %9 = vector.broadcast %cst_4 : f32 to vector<8x256xf32>
    %10 = arith.mulf %9, %8 : vector<8x256xf32>
    %11 = math.tanh %10 : vector<8x256xf32>
    %cst_5 = arith.constant 5.000000e-01 : f32
    %12 = vector.broadcast %cst_5 : f32 to vector<8x256xf32>
    %13 = arith.mulf %12, %11 : vector<8x256xf32>
    %cst_6 = arith.constant 1.000000e+00 : f32
    %14 = vector.broadcast %cst_6 : f32 to vector<8x256xf32>
    %15 = arith.addf %14, %13 : vector<8x256xf32>
    %16 = arith.mulf %5, %15 : vector<8x256xf32>
    %c0_7 = arith.constant 0 : index
    %c0_8 = arith.constant 0 : index
    %17 = vector.load %arg2[%c0_7, %c0_8] : memref<8x256xf32, #tpu.memory_space<vmem>>, vector<8x256xf32>
    tpu.vector_store %arg2[%c0_7, %c0_8], %16 {strides = array<i32>} : memref<8x256xf32, #tpu.memory_space<vmem>>, vector<8x256xf32>,
    return
  }
  func.func @transform_0(%arg0: i32) -> (i32, i32) {
    %c0_i32 = arith.constant 0 : i32
    %c0_i32_0 = arith.constant 0 : i32
    return %arg0, %c0_i32 : i32, i32
  }
  func.func @transform_1(%arg0: i32) -> (i32, i32) {
    %c0_i32 = arith.constant 0 : i32
    %c0_i32_0 = arith.constant 0 : i32
    return %arg0, %c0_i32 : i32, i32
  }
}

</mosaic_0001>

<llo_original>
// kernel: tpu_custom_call.1
$region0: #{tpu_custom_call.1}
  #allocation0 [shape = 'u32[]', space=smem, size = 0x4, offset = 0x4, fixed_abs, tag = 'smem constant byte address 0x4 - core index']
  #allocation1 [shape = 'u32[144,128]{1,0:T(1,128)}', space=vmem, size = 0x12000, scoped, tag = 'internal scratch']
  %s0 = inlined_call_operand.hbm [shape: f32[8,256], index: 0, kind: input, shape index: {}]
  %s1 = inlined_call_operand.hbm [shape: f32[8,256], index: 1, kind: output, shape index: {}]
  %s2 = sld [smem:[#allocation0]]
  $region18: #{tpu_custom_call.1} parent=0
    _
  %s4 = ssub.s32 1, %s2
  %s5 = scalar_select 0, %s4, %s2
  $region1: #{tpu_custom_call.1} parent=0
    #allocation2 [shape = 'u8[8192]{0}', space=vmem, size = 0x2000, scoped, tag = 'input window, operand 0, single buffered']
    #allocation3 [shape = 's32[1]{0}', space=sflag, size = 0x4, scoped, tag = 'scoped memory for tpu_custom_call.1']
    #allocation4 [shape = 's32[1]{0}', space=sflag, size = 0x4, scoped, tag = 'scoped memory for tpu_custom_call.1']
    #allocation5 [shape = 'u8[8192]{0}', space=vmem, size = 0x2000, scoped, tag = 'output window, operand 0, single buffered']
    %6 = vsyncpa [#allocation3], 0
    %7 = vsyncpa [#allocation4], 0
    // Predicated region
    $region2: #{tpu_custom_call.1} parent=1 // pred_check
      _
    $region3: #{tpu_custom_call.1} parent=1 // pred_check_branch
      %9 = sbr.rel (0) target = $region5
    $region4: #{tpu_custom_call.1} parent=1 // pred_region
      %s11 = ssub.s32 256, 256
      %12 = vsyncadd [#allocation3], %s11
      %s14 = sshll.u32 [#allocation2], 4
      %s15 = int_to_ptr.vmem [resolvable:$true] %s14
      %17 = dma.hbm_to_vmem [thread:$0]  %s0, 256, %s15, [#allocation3]
    $region5: #{tpu_custom_call.1} parent=1 // pred_fallthru
      _
    // Predicated region
    $region6: #{tpu_custom_call.1} parent=1 // pred_check
      _
    $region7: #{tpu_custom_call.1} parent=1 // pred_check_branch
      %19 = sbr.rel (0) target = $region9
    $region8: #{tpu_custom_call.1} parent=1 // pred_region
      %20 = dma.done [#allocation3], 256
    $region9: #{tpu_custom_call.1} parent=1 // pred_fallthru
      _
    %v21 = vld [vmem:[#allocation2] sm:$0xff]
    %v22 = vld [vmem:[#allocation2 + $0x8] sm:$0xff]
    %v23 = vadd.f32 %v21, %v22
    %24 = vadd.xlane.f32.xlu0 %v23
    %v25 = vpop.xlane.xlu0 %24
    %v26 = vmul.f32 %v25, 0.00390625
    %v27 = vsub.f32 %v21, %v26
    %v28 = vsub.f32 %v22, %v26
    %v29 = vmul.f32 %v27, %v27
    %v30 = vmul.f32 %v28, %v28
    %v31 = vmul.f32 %v29, 0.5
    %v32 = vmul.f32 %v30, 0.5
    %v33 = vtanh.pop %v31
    %v34 = vtanh.pop %v32
    %v35 = vmul.f32 %v33, 0.5
    %v36 = vmul.f32 %v34, 0.5
    %v37 = vadd.f32 %v35, 1.0
    %v38 = vadd.f32 %v36, 1.0
    %v39 = vmul.f32 %v21, %v37
    %v40 = vmul.f32 %v22, %v38
    %41 = vst [vmem:[#allocation5] sm:$0xff] %v39
    %42 = vst [vmem:[#allocation5 + $0x8] sm:$0xff] %v40
    // Predicated region
    $region10: #{tpu_custom_call.1} parent=1 // pred_check
      _
    $region11: #{tpu_custom_call.1} parent=1 // pred_check_branch
      %44 = sbr.rel (0) target = $region13
    $region12: #{tpu_custom_call.1} parent=1 // pred_region
      %s46 = ssub.s32 256, 256
      %47 = vsyncadd [#allocation4], %s46
      %s49 = sshll.u32 [#allocation5], 4
      %s50 = int_to_ptr.vmem [resolvable:$true] %s49
      %52 = dma.vmem_to_hbm [thread:$0]  %s50, 256, %s1, [#allocation4]
    $region13: #{tpu_custom_call.1} parent=1 // pred_fallthru
      _
    // Predicated region
    $region14: #{tpu_custom_call.1} parent=1 // pred_check
      _
    $region15: #{tpu_custom_call.1} parent=1 // pred_check_branch
      %54 = sbr.rel (0) target = $region17
    $region16: #{tpu_custom_call.1} parent=1 // pred_region
      %55 = dma.done [#allocation4], 256
    $region17: #{tpu_custom_call.1} parent=1 // pred_fallthru
      _
    %56 = vsyncpa [#allocation3], 1
    %57 = vsyncpa [#allocation4], 1

</llo_original>
